<compile_context>
chip_gen: v7x
topology: tpu7x:2x2x1
jax: 0.10.0
libtpu: 0.0.40
codegen_flags: <defaults>
</compile_context>

<pallas_src>
import math

import jax
import jax.numpy as jnp
from jax.experimental import pallas as pl
from jax.experimental.pallas import tpu as pltpu


_P = 128                 # padded lane width for in_features, out_features, 2*out_features
_MAX_BATCH_TILE = 512    # default cap on rows per grid step


# ---------------------------------------------------------------------------
# Kernel A: one-shot masked-weight computation (runs once, all f32).
# ---------------------------------------------------------------------------
def _masked_weight_kernel(wt_ref, mlpw_ref, bvec_ref, mwt_ref):
    """mwt = weight.T * mask.T  (layout (in, out)), emitted as a bf16 GEMM operand."""
    wt = wt_ref[...]                                  # (P, P) f32, (in, out), zero-padded

    # Packed, host-pre-transposed MaskBlock weights (static slices of one slab).
    we1 = mlpw_ref[0 * _P:1 * _P, :]                  # extractor1.weight.T  (out, 2out)
    wp1 = mlpw_ref[1 * _P:2 * _P, :]                  # projector1.weight.T  (2out, out)
    we2 = mlpw_ref[2 * _P:3 * _P, :]                  # extractor2.weight.T
    wp2 = mlpw_ref[3 * _P:4 * _P, :]                  # projector2.weight.T
    be1 = bvec_ref[0:1, :]
    bp1 = bvec_ref[1:2, :]
    be2 = bvec_ref[2:3, :]
    bp2 = bvec_ref[3:4, :]

    # MaskBlock 1: sigmoid(projector(relu(extractor(weight.T)))).
    h1 = jnp.maximum(jnp.dot(wt, we1, preferred_element_type=jnp.float32) + be1, 0.0)
    m1 = jax.nn.sigmoid(jnp.dot(h1, wp1, preferred_element_type=jnp.float32) + bp1)
    # MaskBlock 2 (the trailing/leading .t() pair in the torch code cancels, so m1
    # is already in the (in, out) layout block 2 consumes).
    h2 = jnp.maximum(jnp.dot(m1, we2, preferred_element_type=jnp.float32) + be2, 0.0)
    m2 = jax.nn.sigmoid(jnp.dot(h2, wp2, preferred_element_type=jnp.float32) + bp2)

    # masked_weight.T = weight.T * mask.T (f32); single bf16 rounding at the end.
    mwt_ref[...] = (wt * m2).astype(mwt_ref.dtype)


# ---------------------------------------------------------------------------
# Kernel B: batch-tiled, batch-parallel GEMM  y = x @ masked_weight.T + bias.
# ---------------------------------------------------------------------------
def _gemm_kernel(x_ref, mwt_ref, bvec_ref, o_ref):
    # x_ref is already bf16 (cast host-side); f32 accumulation on the MXU.
    y = jnp.dot(x_ref[...], mwt_ref[...], preferred_element_type=jnp.float32)
    o_ref[...] = (y + bvec_ref[4:5, :]).astype(o_ref.dtype)


def projected_masked_linear(x, w, bias, blk1, blk2, *, max_batch_tile=_MAX_BATCH_TILE):
    we1, be1, wp1, bp1 = blk1
    we2, be2, wp2, bp2 = blk2
    batch, in_f = x.shape
    out_f = w.shape[0]
    assert in_f <= _P and 2 * out_f <= _P, (
        "single-tile fused kernel: feature dims must fit one 128-lane tile")
    # TODO(synk): for production layer sizes add an in_features reduction grid axis
    # (VMEM accumulator, "arbitrary", last) and tile out_features.

    # Batch tile: as large as possible (amortizes ~0.35 us/step pipeline overhead),
    # multiple of 16 (bf16 sublane packing), clamped to the (rounded-up) batch.
    b_tile = max(16, min(int(max_batch_tile), pl.cdiv(batch, 16) * 16))
    b_tile = (b_tile // 16) * 16
    bpad = pl.cdiv(batch, b_tile) * b_tile

    def pad2(a, rows, cols):
        return jnp.pad(a, ((0, rows - a.shape[0]), (0, cols - a.shape[1])))

    def pad1(v):
        return jnp.pad(v, (0, _P - v.shape[0]))

    # Host-side layout prep (one-time, tiny): pre-transpose + zero-pad + pack.
    x_p = pad2(x, bpad, _P).astype(jnp.bfloat16)                   # (bpad, P) bf16
    wt_p = pad2(w.T.astype(jnp.float32), _P, _P)                   # (P, P) f32, (in, out)
    mlpw = jnp.concatenate(
        [pad2(we1.T, _P, _P), pad2(wp1.T, _P, _P),
         pad2(we2.T, _P, _P), pad2(wp2.T, _P, _P)],
        axis=0).astype(jnp.float32)                                # (4P, P) f32
    zero = jnp.zeros((_P,), jnp.float32)
    bvec = jnp.stack([pad1(be1), pad1(bp1), pad1(be2), pad1(bp2), pad1(bias),
                      zero, zero, zero], axis=0).astype(jnp.float32)  # (8, P) f32

    # --- Kernel A: masked weight, computed ONCE, hoisted out of the batch grid.
    mwt = pl.pallas_call(
        _masked_weight_kernel,
        out_shape=jax.ShapeDtypeStruct((_P, _P), jnp.bfloat16),
        grid=(1,),
        in_specs=[pl.BlockSpec((_P, _P), lambda i: (0, 0)),
                  pl.BlockSpec((4 * _P, _P), lambda i: (0, 0)),
                  pl.BlockSpec((8, _P), lambda i: (0, 0))],
        out_specs=pl.BlockSpec((_P, _P), lambda i: (0, 0)),
        cost_estimate=pl.CostEstimate(
            flops=8 * _P ** 3, transcendentals=2 * _P * _P,
            bytes_accessed=(wt_p.size + mlpw.size + bvec.size) * 4 + _P * _P * 2),
    )(wt_p, mlpw, bvec)

    # --- Kernel B: batch-parallel lane-dense GEMM.
    # VMEM budget: double-buffered x/out tiles + resident masked weight & biases,
    # plus headroom, capped below v7x's 64 MiB physical VMEM.
    tile_bytes = b_tile * _P * (2 + 4)                 # bf16 x tile + f32 out tile
    resident_bytes = _P * _P * 2 + 8 * _P * 4          # mwt (bf16) + bias slab (f32)
    vmem_limit = int(min(max(2 * tile_bytes + resident_bytes + (4 << 20), 16 << 20),
                         48 << 20))

    out = pl.pallas_call(
        _gemm_kernel,
        out_shape=jax.ShapeDtypeStruct((bpad, _P), jnp.float32),
        grid=(bpad // b_tile,),
        in_specs=[
            pl.BlockSpec((b_tile, _P), lambda b: (b, 0)),   # x batch tile (bf16)
            pl.BlockSpec((_P, _P), lambda b: (0, 0)),       # masked weight (resident)
            pl.BlockSpec((8, _P), lambda b: (0, 0)),        # packed biases (resident)
        ],
        out_specs=pl.BlockSpec((b_tile, _P), lambda b: (b, 0)),
        compiler_params=pltpu.CompilerParams(
            # No cross-tile state -> batch tiles may shard across both v7x TCs.
            dimension_semantics=("parallel",),
            vmem_limit_bytes=vmem_limit),
        cost_estimate=pl.CostEstimate(
            flops=2 * bpad * _P * _P, transcendentals=0,
            bytes_accessed=x_p.size * 2 + resident_bytes + bpad * _P * 4),
    )(x_p, mwt, bvec)
    return out[:batch, :out_f]


def reference_forward(x, w, bias, blk1, blk2):
    """Pure-JAX f32 reference mirroring the PyTorch forward."""
    def mask_block(xin, params):
        we, be, wp, bp = params
        h = jax.nn.relu(xin @ we.T + be)
        return jax.nn.sigmoid(h @ wp.T + bp)

    mask_t = w.T                             # (in, out)  == mask.t()
    mask_t = mask_block(mask_t, blk1)        # (in, out)
    mask_t = mask_block(mask_t, blk2)        # (in, out)
    masked_weight = w * mask_t.T             # (out, in)
    return x @ masked_weight.T + bias


def init_params(key, in_features, out_features):
    ks = jax.random.split(key, 4)

    # Main weight: kaiming_uniform_(a=sqrt(5)) -> bound = 1/sqrt(fan_in)
    bw = 1.0 / math.sqrt(in_features)
    w = jax.random.uniform(ks[0], (out_features, in_features), jnp.float32, -bw, bw)
    # bias: uniform(-1/sqrt(fan_in), 1/sqrt(fan_in))
    bb = 1.0 / math.sqrt(in_features)
    bias = jax.random.uniform(ks[1], (out_features,), jnp.float32, -bb, bb)

    def make_block(k):
        k1, k2 = jax.random.split(k)
        # extractor: kaiming_uniform_(mode='fan_in', nonlinearity='relu')
        be_bound = math.sqrt(2.0) * math.sqrt(3.0 / out_features)
        we = jax.random.uniform(k1, (2 * out_features, out_features),
                                jnp.float32, -be_bound, be_bound)
        be = jnp.zeros((2 * out_features,), jnp.float32)
        # projector: xavier_uniform_
        bp_bound = math.sqrt(6.0 / (2 * out_features + out_features))
        wp = jax.random.uniform(k2, (out_features, 2 * out_features),
                                jnp.float32, -bp_bound, bp_bound)
        bp = jnp.zeros((out_features,), jnp.float32)
        return we, be, wp, bp

    return w, bias, make_block(ks[2]), make_block(ks[3])


if __name__ == "__main__":
    in_features = 32
    out_features = 16
    batch = 64            # with max_batch_tile=32 -> two grid steps (parallel axis)

    key = jax.random.PRNGKey(0)
    kp, kx = jax.random.split(key)
    w, bias, blk1, blk2 = init_params(kp, in_features, out_features)
    x = jax.random.normal(kx, (batch, in_features), jnp.float32)

    out = projected_masked_linear(x, w, bias, blk1, blk2, max_batch_tile=32)
    out = jax.block_until_ready(out)

    ref = reference_forward(x, w, bias, blk1, blk2)
    assert out.shape == (batch, out_features)
    # Only the final GEMM uses bf16 operands (f32 accumulate); mask MLP is all-f32.
    assert jnp.allclose(out, ref, atol=2e-2, rtol=2e-2), "mismatch vs reference"
    print("KERNEL_OK")
</pallas_src>

<mosaic_0001>
module attributes {stable_mosaic.version = 11 : i64} {
  func.func @_masked_weight_kernel(%arg0: i32, %arg1: memref<128x128xf32, #tpu.memory_space<vmem>>, %arg2: memref<512x128xf32, #tpu.memory_space<vmem>>, %arg3: memref<8x128xf32, #tpu.memory_space<vmem>>, %arg4: memref<128x128xbf16, #tpu.memory_space<vmem>>) attributes {dimension_semantics = [#tpu.dimension_semantics<arbitrary>], iteration_bounds = array<i64: 1>, scalar_prefetch = 0 : i64, scratch_operands = 0 : i64, tpu.core_type = #tpu.core_type<tc>, window_params = [{pipeline_mode = #tpu.pipeline_mode<synchronous>, transform_indices = @transform_0, window_bounds = array<i64: 128, 128>}, {pipeline_mode = #tpu.pipeline_mode<synchronous>, transform_indices = @transform_1, window_bounds = array<i64: 512, 128>}, {pipeline_mode = #tpu.pipeline_mode<synchronous>, transform_indices = @transform_2, window_bounds = array<i64: 8, 128>}, {pipeline_mode = #tpu.pipeline_mode<synchronous>, transform_indices = @transform_3, window_bounds = array<i64: 128, 128>}]} {
    %c0 = arith.constant 0 : index
    %c0_0 = arith.constant 0 : index
    %0 = vector.load %arg1[%c0, %c0_0] : memref<128x128xf32, #tpu.memory_space<vmem>>, vector<128x128xf32>
    %c0_1 = arith.constant 0 : index
    %c0_2 = arith.constant 0 : index
    %1 = vector.load %arg2[%c0_1, %c0_2] : memref<512x128xf32, #tpu.memory_space<vmem>>, vector<128x128xf32>
    %c128 = arith.constant 128 : index
    %c0_3 = arith.constant 0 : index
    %2 = vector.load %arg2[%c128, %c0_3] : memref<512x128xf32, #tpu.memory_space<vmem>>, vector<128x128xf32>
    %c256 = arith.constant 256 : index
    %c0_4 = arith.constant 0 : index
    %3 = vector.load %arg2[%c256, %c0_4] : memref<512x128xf32, #tpu.memory_space<vmem>>, vector<128x128xf32>
    %c384 = arith.constant 384 : index
    %c0_5 = arith.constant 0 : index
    %4 = vector.load %arg2[%c384, %c0_5] : memref<512x128xf32, #tpu.memory_space<vmem>>, vector<128x128xf32>
    %c0_6 = arith.constant 0 : index
    %c0_7 = arith.constant 0 : index
    %5 = vector.load %arg3[%c0_6, %c0_7] : memref<8x128xf32, #tpu.memory_space<vmem>>, vector<1x128xf32>
    %c1 = arith.constant 1 : index
    %c0_8 = arith.constant 0 : index
    %6 = vector.load %arg3[%c1, %c0_8] : memref<8x128xf32, #tpu.memory_space<vmem>>, vector<1x128xf32>
    %c2 = arith.constant 2 : index
    %c0_9 = arith.constant 0 : index
    %7 = vector.load %arg3[%c2, %c0_9] : memref<8x128xf32, #tpu.memory_space<vmem>>, vector<1x128xf32>
    %c3 = arith.constant 3 : index
    %c0_10 = arith.constant 0 : index
    %8 = vector.load %arg3[%c3, %c0_10] : memref<8x128xf32, #tpu.memory_space<vmem>>, vector<1x128xf32>
    %cst = arith.constant dense<0.000000e+00> : vector<128x128xf32>
    %9 = tpu.matmul %0, %1, %cst {dimension_numbers = #tpu.dot_dimension_numbers<[1], [0], [0], [1], [0, 0, 1, 1], [], []>} : vector<128x128xf32>, vector<128x128xf32>, vector<128x128xf32> -> vector<128x128xf32>
    %10 = vector.broadcast %5 : vector<1x128xf32> to vector<128x128xf32>
    %11 = arith.addf %9, %10 : vector<128x128xf32>
    %cst_11 = arith.constant 0.000000e+00 : f32
    %12 = vector.broadcast %cst_11 : f32 to vector<128x128xf32>
    %13 = arith.maximumf %11, %12 : vector<128x128xf32>
    %cst_12 = arith.constant dense<0.000000e+00> : vector<128x128xf32>
    %14 = tpu.matmul %13, %2, %cst_12 {dimension_numbers = #tpu.dot_dimension_numbers<[1], [0], [0], [1], [0, 0, 1, 1], [], []>} : vector<128x128xf32>, vector<128x128xf32>, vector<128x128xf32> -> vector<128x128xf32>
    %15 = vector.broadcast %6 : vector<1x128xf32> to vector<128x128xf32>
    %16 = arith.addf %14, %15 : vector<128x128xf32>
    %17 = arith.negf %16 : vector<128x128xf32>
    %18 = math.exp %17 : vector<128x128xf32>
    %cst_13 = arith.constant 1.000000e+00 : f32
    %19 = vector.broadcast %cst_13 : f32 to vector<128x128xf32>
    %20 = arith.addf %19, %18 : vector<128x128xf32>
    %21 = arith.divf %19, %20 : vector<128x128xf32>
    %cst_14 = arith.constant dense<0.000000e+00> : vector<128x128xf32>
    %22 = tpu.matmul %21, %3, %cst_14 {dimension_numbers = #tpu.dot_dimension_numbers<[1], [0], [0], [1], [0, 0, 1, 1], [], []>} : vector<128x128xf32>, vector<128x128xf32>, vector<128x128xf32> -> vector<128x128xf32>
    %23 = vector.broadcast %7 : vector<1x128xf32> to vector<128x128xf32>
    %24 = arith.addf %22, %23 : vector<128x128xf32>
    %cst_15 = arith.constant 0.000000e+00 : f32
    %25 = vector.broadcast %cst_15 : f32 to vector<128x128xf32>
    %26 = arith.maximumf %24, %25 : vector<128x128xf32>
    %cst_16 = arith.constant dense<0.000000e+00> : vector<128x128xf32>
    %27 = tpu.matmul %26, %4, %cst_16 {dimension_numbers = #tpu.dot_dimension_numbers<[1], [0], [0], [1], [0, 0, 1, 1], [], []>} : vector<128x128xf32>, vector<128x128xf32>, vector<128x128xf32> -> vector<128x128xf32>
    %28 = vector.broadcast %8 : vector<1x128xf32> to vector<128x128xf32>
    %29 = arith.addf %27, %28 : vector<128x128xf32>
    %30 = arith.negf %29 : vector<128x128xf32>
    %31 = math.exp %30 : vector<128x128xf32>
    %cst_17 = arith.constant 1.000000e+00 : f32
    %32 = vector.broadcast %cst_17 : f32 to vector<128x128xf32>
    %33 = arith.addf %32, %31 : vector<128x128xf32>
    %34 = arith.divf %32, %33 : vector<128x128xf32>
    %35 = arith.mulf %0, %34 : vector<128x128xf32>
    %36 = arith.truncf %35 : vector<128x128xf32> to vector<128x128xbf16>
    %c0_18 = arith.constant 0 : index
    %c0_19 = arith.constant 0 : index
    %37 = vector.load %arg4[%c0_18, %c0_19] : memref<128x128xbf16, #tpu.memory_space<vmem>>, vector<128x128xbf16>
    tpu.vector_store %arg4[%c0_18, %c0_19], %36 {strides = array<i32>} : memref<128x128xbf16, #tpu.memory_space<vmem>>, vector<128x128xbf16>,
    return
  }
  func.func @transform_0(%arg0: i32) -> (i32, i32) {
    %c0_i32 = arith.constant 0 : i32
    %c0_i32_0 = arith.constant 0 : i32
    %c0_i32_1 = arith.constant 0 : i32
    return %c0_i32, %c0_i32_0 : i32, i32
  }
  func.func @transform_1(%arg0: i32) -> (i32, i32) {
    %c0_i32 = arith.constant 0 : i32
    %c0_i32_0 = arith.constant 0 : i32
    %c0_i32_1 = arith.constant 0 : i32
    return %c0_i32, %c0_i32_0 : i32, i32
  }
  func.func @transform_2(%arg0: i32) -> (i32, i32) {
    %c0_i32 = arith.constant 0 : i32
    %c0_i32_0 = arith.constant 0 : i32
    %c0_i32_1 = arith.constant 0 : i32
    return %c0_i32, %c0_i32_0 : i32, i32
  }
  func.func @transform_3(%arg0: i32) -> (i32, i32) {
    %c0_i32 = arith.constant 0 : i32
    %c0_i32_0 = arith.constant 0 : i32
    %c0_i32_1 = arith.constant 0 : i32
    return %c0_i32, %c0_i32_0 : i32, i32
  }
}

</mosaic_0001>

<llo_original>
// kernel: tpu_custom_call.1
$region0: #{tpu_custom_call.1}
  #allocation0 [shape = 'u32[]', space=smem, size = 0x4, offset = 0x4, fixed_abs, tag = 'smem constant byte address 0x4 - core index']
  #allocation1 [shape = 'u32[144,128]{1,0:T(1,128)}', space=vmem, size = 0x12000, scoped, tag = 'internal scratch']
  %s0 = inlined_call_operand.hbm [shape: f32[128,128], index: 0, kind: input, shape index: {}]
  %s1 = inlined_call_operand.hbm [shape: f32[512,128], index: 1, kind: input, shape index: {}]
  %s2 = inlined_call_operand.hbm [shape: f32[8,128], index: 2, kind: input, shape index: {}]
  %s3 = inlined_call_operand.hbm [shape: bf16[128,128], index: 3, kind: output, shape index: {}]
  %s4 = sld [smem:[#allocation0]]
  $region34: #{tpu_custom_call.1} parent=0
    _
  %s6 = ssub.s32 1, %s4
  %s7 = scalar_select 0, %s6, %s4
  $region1: #{tpu_custom_call.1} parent=0
    #allocation2 [shape = 'u8[65536]{0}', space=vmem, size = 0x10000, scoped, tag = 'input window, operand 0, single buffered']
    #allocation3 [shape = 's32[1]{0}', space=sflag, size = 0x4, scoped, tag = 'scoped memory for tpu_custom_call.1']
    #allocation4 [shape = 's32[1]{0}', space=sflag, size = 0x4, scoped, tag = 'scoped memory for tpu_custom_call.1']
    #allocation5 [shape = 'u8[262144]{0}', space=vmem, size = 0x40000, scoped, tag = 'input window, operand 1, single buffered']
    #allocation6 [shape = 's32[1]{0}', space=sflag, size = 0x4, scoped, tag = 'scoped memory for tpu_custom_call.1']
    #allocation7 [shape = 'u8[4096]{0}', space=vmem, size = 0x1000, scoped, tag = 'input window, operand 2, single buffered']
    #allocation8 [shape = 'u8[32768]{0}', space=vmem, size = 0x8000, scoped, tag = 'output window, operand 0, single buffered']
    %8 = vsyncpa [#allocation3], 0
    %9 = vsyncpa [#allocation6], 0
    %10 = vsyncpa [#allocation4], 0
    // Predicated region
    $region2: #{tpu_custom_call.1} parent=1 // pred_check
      _
    $region3: #{tpu_custom_call.1} parent=1 // pred_check_branch
      %12 = sbr.rel (0) target = $region5
    $region4: #{tpu_custom_call.1} parent=1 // pred_region
      %s14 = ssub.s32 2048, 2048
      %15 = vsyncadd [#allocation3], %s14
      %s16 = sshll.u32 [#allocation2], 4
      %s17 = int_to_ptr.vmem [resolvable:$true] %s16
      %22 = dma.hbm_to_vmem [thread:$0]  %s0, 2048, %s17, [#allocation3], 128, 128, 8
    $region5: #{tpu_custom_call.1} parent=1 // pred_fallthru
      _
    // Predicated region
    $region6: #{tpu_custom_call.1} parent=1 // pred_check
      _
    $region7: #{tpu_custom_call.1} parent=1 // pred_check_branch
      %24 = sbr.rel (0) target = $region9
    $region8: #{tpu_custom_call.1} parent=1 // pred_region
      %s26 = ssub.s32 8192, 8192
      %27 = vsyncadd [#allocation6], %s26
      %s28 = sshll.u32 [#allocation5], 4
      %s29 = int_to_ptr.vmem [resolvable:$true] %s28
      %34 = dma.hbm_to_vmem [thread:$0]  %s1, 8192, %s29, [#allocation6], 128, 128, 8
    $region9: #{tpu_custom_call.1} parent=1 // pred_fallthru
      _
    // Predicated region
    $region10: #{tpu_custom_call.1} parent=1 // pred_check
      _
    $region11: #{tpu_custom_call.1} parent=1 // pred_check_branch
      %36 = sbr.rel (0) target = $region13
    $region12: #{tpu_custom_call.1} parent=1 // pred_region
      %s38 = ssub.s32 128, 128
      %39 = vsyncadd [#allocation6], %s38
      %s41 = sshll.u32 [#allocation7], 4
      %s42 = int_to_ptr.vmem [resolvable:$true] %s41
      %44 = dma.hbm_to_vmem [thread:$0]  %s2, 128, %s42, [#allocation6]
    $region13: #{tpu_custom_call.1} parent=1 // pred_fallthru
      _
    // Predicated region
    $region14: #{tpu_custom_call.1} parent=1 // pred_check
      _
    $region15: #{tpu_custom_call.1} parent=1 // pred_check_branch
      %46 = sbr.rel (0) target = $region17
    $region16: #{tpu_custom_call.1} parent=1 // pred_region
      %47 = dma.done [#allocation3], 2048
    $region17: #{tpu_custom_call.1} parent=1 // pred_fallthru
      _
    // Predicated region
    $region18: #{tpu_custom_call.1} parent=1 // pred_check
      _
    $region19: #{tpu_custom_call.1} parent=1 // pred_check_branch
      %49 = sbr.rel (0) target = $region21
    $region20: #{tpu_custom_call.1} parent=1 // pred_region
      %50 = dma.done [#allocation6], 8192
    $region21: #{tpu_custom_call.1} parent=1 // pred_fallthru
      _
    // Predicated region
    $region22: #{tpu_custom_call.1} parent=1 // pred_check
      _
    $region23: #{tpu_custom_call.1} parent=1 // pred_check_branch
      %52 = sbr.rel (0) target = $region25
    $region24: #{tpu_custom_call.1} parent=1 // pred_region
      %53 = dma.done [#allocation6], 128
    $region25: #{tpu_custom_call.1} parent=1 // pred_fallthru
      _
    %v54 = vld [vmem:[#allocation2] sm:$0xff]
    %v55 = vld [vmem:[#allocation2 + $0x8] sm:$0xff]
    %v56 = vld [vmem:[#allocation2 + $0x10] sm:$0xff]
    %v57 = vld [vmem:[#allocation2 + $0x18] sm:$0xff]
    %v58 = vld [vmem:[#allocation2 + $0x20] sm:$0xff]
    %v59 = vld [vmem:[#allocation2 + $0x28] sm:$0xff]
    %v60 = vld [vmem:[#allocation2 + $0x30] sm:$0xff]
    %v61 = vld [vmem:[#allocation2 + $0x38] sm:$0xff]
    %v62 = vld [vmem:[#allocation2 + $0x40] sm:$0xff]
    %v63 = vld [vmem:[#allocation2 + $0x48] sm:$0xff]
    %v64 = vld [vmem:[#allocation2 + $0x50] sm:$0xff]
    %v65 = vld [vmem:[#allocation2 + $0x58] sm:$0xff]
    %v66 = vld [vmem:[#allocation2 + $0x60] sm:$0xff]
    %v67 = vld [vmem:[#allocation2 + $0x68] sm:$0xff]
    %v68 = vld [vmem:[#allocation2 + $0x70] sm:$0xff]
    %v69 = vld [vmem:[#allocation2 + $0x78] sm:$0xff]
    %v70 = vld [vmem:[#allocation5] sm:$0xff]
    %v71 = vld [vmem:[#allocation5 + $0x8] sm:$0xff]
    %v72 = vld [vmem:[#allocation5 + $0x10] sm:$0xff]
    %v73 = vld [vmem:[#allocation5 + $0x18] sm:$0xff]
    %v74 = vld [vmem:[#allocation5 + $0x20] sm:$0xff]
    %v75 = vld [vmem:[#allocation5 + $0x28] sm:$0xff]
    %v76 = vld [vmem:[#allocation5 + $0x30] sm:$0xff]
    %v77 = vld [vmem:[#allocation5 + $0x38] sm:$0xff]
    %v78 = vld [vmem:[#allocation5 + $0x40] sm:$0xff]
    %v79 = vld [vmem:[#allocation5 + $0x48] sm:$0xff]
    %v80 = vld [vmem:[#allocation5 + $0x50] sm:$0xff]
    %v81 = vld [vmem:[#allocation5 + $0x58] sm:$0xff]
    %v82 = vld [vmem:[#allocation5 + $0x60] sm:$0xff]
    %v83 = vld [vmem:[#allocation5 + $0x68] sm:$0xff]
    %v84 = vld [vmem:[#allocation5 + $0x70] sm:$0xff]
    %v85 = vld [vmem:[#allocation5 + $0x78] sm:$0xff]
    %v86 = vld [vmem:[#allocation5 + $0x80] sm:$0xff]
    %v87 = vld [vmem:[#allocation5 + $0x88] sm:$0xff]
    %v88 = vld [vmem:[#allocation5 + $0x90] sm:$0xff]
    %v89 = vld [vmem:[#allocation5 + $0x98] sm:$0xff]
    %v90 = vld [vmem:[#allocation5 + $0xa0] sm:$0xff]
    %v91 = vld [vmem:[#allocation5 + $0xa8] sm:$0xff]
    %v92 = vld [vmem:[#allocation5 + $0xb0] sm:$0xff]
    %v93 = vld [vmem:[#allocation5 + $0xb8] sm:$0xff]
    %v94 = vld [vmem:[#allocation5 + $0xc0] sm:$0xff]
    %v95 = vld [vmem:[#allocation5 + $0xc8] sm:$0xff]
    %v96 = vld [vmem:[#allocation5 + $0xd0] sm:$0xff]
    %v97 = vld [vmem:[#allocation5 + $0xd8] sm:$0xff]
    %v98 = vld [vmem:[#allocation5 + $0xe0] sm:$0xff]
    %v99 = vld [vmem:[#allocation5 + $0xe8] sm:$0xff]
    %v100 = vld [vmem:[#allocation5 + $0xf0] sm:$0xff]
    %v101 = vld [vmem:[#allocation5 + $0xf8] sm:$0xff]
    %v102 = vld [vmem:[#allocation5 + $0x100] sm:$0xff]
    %v103 = vld [vmem:[#allocation5 + $0x108] sm:$0xff]
    %v104 = vld [vmem:[#allocation5 + $0x110] sm:$0xff]
    %v105 = vld [vmem:[#allocation5 + $0x118] sm:$0xff]
    %v106 = vld [vmem:[#allocation5 + $0x120] sm:$0xff]
    %v107 = vld [vmem:[#allocation5 + $0x128] sm:$0xff]
    %v108 = vld [vmem:[#allocation5 + $0x130] sm:$0xff]
    %v109 = vld [vmem:[#allocation5 + $0x138] sm:$0xff]
    %v110 = vld [vmem:[#allocation5 + $0x140] sm:$0xff]
    %v111 = vld [vmem:[#allocation5 + $0x148] sm:$0xff]
    %v112 = vld [vmem:[#allocation5 + $0x150] sm:$0xff]
    %v113 = vld [vmem:[#allocation5 + $0x158] sm:$0xff]
    %v114 = vld [vmem:[#allocation5 + $0x160] sm:$0xff]
    %v115 = vld [vmem:[#allocation5 + $0x168] sm:$0xff]
    %v116 = vld [vmem:[#allocation5 + $0x170] sm:$0xff]
    %v117 = vld [vmem:[#allocation5 + $0x178] sm:$0xff]
    %v118 = vld [vmem:[#allocation5 + $0x180] sm:$0xff]
    %v119 = vld [vmem:[#allocation5 + $0x188] sm:$0xff]
    %v120 = vld [vmem:[#allocation5 + $0x190] sm:$0xff]
    %v121 = vld [vmem:[#allocation5 + $0x198] sm:$0xff]
    %v122 = vld [vmem:[#allocation5 + $0x1a0] sm:$0xff]
    %v123 = vld [vmem:[#allocation5 + $0x1a8] sm:$0xff]
    %v124 = vld [vmem:[#allocation5 + $0x1b0] sm:$0xff]
    %v125 = vld [vmem:[#allocation5 + $0x1b8] sm:$0xff]
    %v126 = vld [vmem:[#allocation5 + $0x1c0] sm:$0xff]
    %v127 = vld [vmem:[#allocation5 + $0x1c8] sm:$0xff]
    %v128 = vld [vmem:[#allocation5 + $0x1d0] sm:$0xff]
    %v129 = vld [vmem:[#allocation5 + $0x1d8] sm:$0xff]
    %v130 = vld [vmem:[#allocation5 + $0x1e0] sm:$0xff]
    %v131 = vld [vmem:[#allocation5 + $0x1e8] sm:$0xff]
    %v132 = vld [vmem:[#allocation5 + $0x1f0] sm:$0xff]
    %v133 = vld [vmem:[#allocation5 + $0x1f8] sm:$0xff]
    %v134 = vld [vmem:[#allocation7] sm:$0x1]
    %v135 = vld [vmem:[#allocation7 + $0x1] sm:$0x1]
    %v136 = vld [vmem:[#allocation7 + $0x2] sm:$0x1]
    %v137 = vld [vmem:[#allocation7 + $0x3] sm:$0x1]
    %v138 = vlaneseq
    %v139 = vshrl.u32 %v138, 7
    %v140 = vsub.s32 0, %v139
    %v141 = vrot.slane %v134, %v140
    %142 = vmatprep.subr.mxu0 0.0
    %143 = vmatpush1.msra.mxu0 %v70
    %144 = vmatprep.subr.mxu0 0.0
    %145 = vmatpush1.msra.mxu0 %v71
    %146 = vmatprep.subr.mxu0 0.0
    %147 = vmatpush1.msra.mxu0 %v72
    %148 = vmatprep.subr.mxu0 0.0
    %149 = vmatpush1.msra.mxu0 %v73
    %150 = vmatprep.subr.mxu0 0.0
    %151 = vmatpush1.msra.mxu0 %v74
    %152 = vmatprep.subr.mxu0 0.0
    %153 = vmatpush1.msra.mxu0 %v75
    %154 = vmatprep.subr.mxu0 0.0
    %155 = vmatpush1.msra.mxu0 %v76
    %156 = vmatprep.subr.mxu0 0.0
    %157 = vmatpush1.msra.mxu0 %v77
    %158 = vmatprep.subr.mxu0 0.0
    %159 = vmatpush1.msra.mxu0 %v78
    %160 = vmatprep.subr.mxu0 0.0
    %161 = vmatpush1.msra.mxu0 %v79
    %162 = vmatprep.subr.mxu0 0.0
    %163 = vmatpush1.msra.mxu0 %v80
    %164 = vmatprep.subr.mxu0 0.0
    %165 = vmatpush1.msra.mxu0 %v81
    %166 = vmatprep.subr.mxu0 0.0
    %167 = vmatpush1.msra.mxu0 %v82
    %168 = vmatprep.subr.mxu0 0.0
    %169 = vmatpush1.msra.mxu0 %v83
    %170 = vmatprep.subr.mxu0 0.0
    %171 = vmatpush1.msra.mxu0 %v84
    %172 = vmatprep.subr.mxu0 0.0
    %173 = vmatpush1.msra.mxu0 %v85
    %174 = vmatprep.subr.mxu0 0.0
    %175 = vmatpush1.msra.mxu0 0.0
    %176 = vmatprep.subr.mxu0 0.0
    %177 = vmatpush1.msra.mxu0 0.0
    %178 = vmatprep.subr.mxu0 0.0
    %179 = vmatpush1.msra.mxu0 0.0
    %180 = vmatprep.subr.mxu0 0.0
    %181 = vmatpush1.msra.mxu0 0.0
    %182 = vmatprep.subr.mxu0 0.0
    %183 = vmatpush1.msra.mxu0 0.0
    %184 = vmatprep.subr.mxu0 0.0
    %185 = vmatpush1.msra.mxu0 0.0
    %186 = vmatprep.subr.mxu0 0.0
    %187 = vmatpush1.msra.mxu0 0.0
    %188 = vmatprep.subr.mxu0 0.0
    %189 = vmatpush1.msra.mxu0 0.0
    %190 = vmatprep.subr.mxu0 0.0
    %191 = vmatpush1.msra.mxu0 0.0
    %192 = vmatprep.subr.mxu0 0.0
    %193 = vmatpush1.msra.mxu0 0.0
    %194 = vmatprep.subr.mxu0 0.0
    %195 = vmatpush1.msra.mxu0 0.0
    %196 = vmatprep.subr.mxu0 0.0
    %197 = vmatpush1.msra.mxu0 0.0
    %198 = vmatprep.subr.mxu0 0.0
    %199 = vmatpush1.msra.mxu0 0.0
    %200 = vmatprep.subr.mxu0 0.0
    %201 = vmatpush1.msra.mxu0 0.0
    %202 = vmatprep.subr.mxu0 0.0
    %203 = vmatpush1.msra.mxu0 0.0
    %204 = vmatprep.subr.mxu0 0.0
    %205 = vmatpush1.msra.mxu0 0.0
    %206 = vmatprep.mubr.f32.mxu0 0.0
    %207 = vmatmul.mubr.f32.gmra.mrb[0].mxu0 %v54
    %v208 = vpop.f32.mrb[0].mxu0
    %v209 = vadd.f32 %v141, %v208
    %v210 = vpop.f32.mrb[0].mxu0
    %211 = vmatprep.mubr.f32.mxu0 0.0
    %212 = vmatmul.mubr.f32.gmra.mrb[0].mxu0 %v55
    %v213 = vpop.f32.mrb[0].mxu0
    %v214 = vadd.f32 %v141, %v213
    %v215 = vpop.f32.mrb[0].mxu0
    %216 = vmatprep.mubr.f32.mxu0 0.0
    %217 = vmatmul.mubr.f32.gmra.mrb[0].mxu0 %v56
    %v218 = vpop.f32.mrb[0].mxu0
    %v219 = vadd.f32 %v141, %v218
    %v220 = vpop.f32.mrb[0].mxu0
    %221 = vmatprep.mubr.f32.mxu0 0.0
    %222 = vmatmul.mubr.f32.gmra.mrb[0].mxu0 %v57
    %v223 = vpop.f32.mrb[0].mxu0
    %v224 = vadd.f32 %v141, %v223
    %v225 = vpop.f32.mrb[0].mxu0
    %226 = vmatprep.mubr.f32.mxu0 0.0
    %227 = vmatmul.mubr.f32.gmra.mrb[0].mxu0 %v58
    %v228 = vpop.f32.mrb[0].mxu0
    %v229 = vadd.f32 %v141, %v228
    %v230 = vpop.f32.mrb[0].mxu0
    %231 = vmatprep.mubr.f32.mxu0 0.0
    %232 = vmatmul.mubr.f32.gmra.mrb[0].mxu0 %v59
    %v233 = vpop.f32.mrb[0].mxu0
    %v234 = vadd.f32 %v141, %v233
    %v235 = vpop.f32.mrb[0].mxu0
    %236 = vmatprep.mubr.f32.mxu0 0.0
    %237 = vmatmul.mubr.f32.gmra.mrb[0].mxu0 %v60
    %v238 = vpop.f32.mrb[0].mxu0
    %v239 = vadd.f32 %v141, %v238
    %v240 = vpop.f32.mrb[0].mxu0
    %241 = vmatprep.mubr.f32.mxu0 0.0
    %242 = vmatmul.mubr.f32.gmra.mrb[0].mxu0 %v61
    %v243 = vpop.f32.mrb[0].mxu0
    %v244 = vadd.f32 %v141, %v243
    %v245 = vpop.f32.mrb[0].mxu0
    %246 = vmatprep.mubr.f32.mxu0 0.0
    %247 = vmatmul.mubr.f32.gmra.mrb[0].mxu0 %v62
    %v248 = vpop.f32.mrb[0].mxu0
    %v249 = vadd.f32 %v141, %v248
    %v250 = vpop.f32.mrb[0].mxu0
    %251 = vmatprep.mubr.f32.mxu0 0.0
    %252 = vmatmul.mubr.f32.gmra.mrb[0].mxu0 %v63
    %v253 = vpop.f32.mrb[0].mxu0
    %v254 = vadd.f32 %v141, %v253
    %v255 = vpop.f32.mrb[0].mxu0
    %256 = vmatprep.mubr.f32.mxu0 0.0
    %257 = vmatmul.mubr.f32.gmra.mrb[0].mxu0 %v64
    %v258 = vpop.f32.mrb[0].mxu0
    %v259 = vadd.f32 %v141, %v258
    %v260 = vpop.f32.mrb[0].mxu0
    %261 = vmatprep.mubr.f32.mxu0 0.0
    %262 = vmatmul.mubr.f32.gmra.mrb[0].mxu0 %v65
    %v263 = vpop.f32.mrb[0].mxu0
    %v264 = vadd.f32 %v141, %v263
    %v265 = vpop.f32.mrb[0].mxu0
    %266 = vmatprep.mubr.f32.mxu0 0.0
    %267 = vmatmul.mubr.f32.gmra.mrb[0].mxu0 %v66
    %v268 = vpop.f32.mrb[0].mxu0
    %v269 = vadd.f32 %v141, %v268
    %v270 = vpop.f32.mrb[0].mxu0
    %271 = vmatprep.mubr.f32.mxu0 0.0
    %272 = vmatmul.mubr.f32.gmra.mrb[0].mxu0 %v67
    %v273 = vpop.f32.mrb[0].mxu0
    %v274 = vadd.f32 %v141, %v273
    %v275 = vpop.f32.mrb[0].mxu0
    %276 = vmatprep.mubr.f32.mxu0 0.0
    %277 = vmatmul.mubr.f32.gmra.mrb[0].mxu0 %v68
    %v278 = vpop.f32.mrb[0].mxu0
    %v279 = vadd.f32 %v141, %v278
    %v280 = vpop.f32.mrb[0].mxu0
    %281 = vmatprep.mubr.f32.mxu0 0.0
    %282 = vmatmul.mubr.f32.gmra.mrb[0].mxu0 %v69
    %v283 = vpop.f32.mrb[0].mxu0
    %v284 = vadd.f32 %v141, %v283
    %v285 = vpop.f32.mrb[0].mxu0
    %286 = vdwg.mxu0
    %v287 = vmax.f32 %v209, 0.0
    %v288 = vmax.f32 %v214, 0.0
    %v289 = vmax.f32 %v219, 0.0
    %v290 = vmax.f32 %v224, 0.0
    %v291 = vmax.f32 %v229, 0.0
    %v292 = vmax.f32 %v234, 0.0
    %v293 = vmax.f32 %v239, 0.0
    %v294 = vmax.f32 %v244, 0.0
    %v295 = vmax.f32 %v249, 0.0
    %v296 = vmax.f32 %v254, 0.0
    %v297 = vmax.f32 %v259, 0.0
    %v298 = vmax.f32 %v264, 0.0
    %v299 = vmax.f32 %v269, 0.0
    %v300 = vmax.f32 %v274, 0.0
    %v301 = vmax.f32 %v279, 0.0
    %v302 = vmax.f32 %v284, 0.0
    %v303 = vlaneseq
    %v304 = vshrl.u32 %v303, 7
    %v305 = vsub.s32 0, %v304
    %v306 = vrot.slane %v135, %v305
    %307 = vmatprep.subr.mxu0 0.0
    %308 = vmatpush1.msra.mxu0 %v86
    %309 = vmatprep.subr.mxu0 0.0
    %310 = vmatpush1.msra.mxu0 %v87
    %311 = vmatprep.subr.mxu0 0.0
    %312 = vmatpush1.msra.mxu0 %v88
    %313 = vmatprep.subr.mxu0 0.0
    %314 = vmatpush1.msra.mxu0 %v89
    %315 = vmatprep.subr.mxu0 0.0
    %316 = vmatpush1.msra.mxu0 %v90
    %317 = vmatprep.subr.mxu0 0.0
    %318 = vmatpush1.msra.mxu0 %v91
    %319 = vmatprep.subr.mxu0 0.0
    %320 = vmatpush1.msra.mxu0 %v92
    %321 = vmatprep.subr.mxu0 0.0
    %322 = vmatpush1.msra.mxu0 %v93
    %323 = vmatprep.subr.mxu0 0.0
    %324 = vmatpush1.msra.mxu0 %v94
    %325 = vmatprep.subr.mxu0 0.0
    %326 = vmatpush1.msra.mxu0 %v95
    %327 = vmatprep.subr.mxu0 0.0
    %328 = vmatpush1.msra.mxu0 %v96
    %329 = vmatprep.subr.mxu0 0.0
    %330 = vmatpush1.msra.mxu0 %v97
    %331 = vmatprep.subr.mxu0 0.0
    %332 = vmatpush1.msra.mxu0 %v98
    %333 = vmatprep.subr.mxu0 0.0
    %334 = vmatpush1.msra.mxu0 %v99
    %335 = vmatprep.subr.mxu0 0.0
    %336 = vmatpush1.msra.mxu0 %v100
    %337 = vmatprep.subr.mxu0 0.0
    %338 = vmatpush1.msra.mxu0 %v101
    %339 = vmatprep.subr.mxu0 0.0
    %340 = vmatpush1.msra.mxu0 0.0
    %341 = vmatprep.subr.mxu0 0.0
    %342 = vmatpush1.msra.mxu0 0.0
    %343 = vmatprep.subr.mxu0 0.0
    %344 = vmatpush1.msra.mxu0 0.0
    %345 = vmatprep.subr.mxu0 0.0
    %346 = vmatpush1.msra.mxu0 0.0
    %347 = vmatprep.subr.mxu0 0.0
    %348 = vmatpush1.msra.mxu0 0.0
    %349 = vmatprep.subr.mxu0 0.0
    %350 = vmatpush1.msra.mxu0 0.0
    %351 = vmatprep.subr.mxu0 0.0
    %352 = vmatpush1.msra.mxu0 0.0
    %353 = vmatprep.subr.mxu0 0.0
    %354 = vmatpush1.msra.mxu0 0.0
    %355 = vmatprep.subr.mxu0 0.0
    %356 = vmatpush1.msra.mxu0 0.0
    %357 = vmatprep.subr.mxu0 0.0
    %358 = vmatpush1.msra.mxu0 0.0
    %359 = vmatprep.subr.mxu0 0.0
    %360 = vmatpush1.msra.mxu0 0.0
    %361 = vmatprep.subr.mxu0 0.0
    %362 = vmatpush1.msra.mxu0 0.0
    %363 = vmatprep.subr.mxu0 0.0
    %364 = vmatpush1.msra.mxu0 0.0
    %365 = vmatprep.subr.mxu0 0.0
    %366 = vmatpush1.msra.mxu0 0.0
    %367 = vmatprep.subr.mxu0 0.0
    %368 = vmatpush1.msra.mxu0 0.0
    %369 = vmatprep.subr.mxu0 0.0
    %370 = vmatpush1.msra.mxu0 0.0
    %371 = vmatprep.mubr.f32.mxu0 0.0
    %372 = vmatmul.mubr.f32.gmra.mrb[0].mxu0 %v287
    %v373 = vpop.f32.mrb[0].mxu0
    %v374 = vadd.f32 %v306, %v373
    %v375 = vpop.f32.mrb[0].mxu0
    %376 = vmatprep.mubr.f32.mxu0 0.0
    %377 = vmatmul.mubr.f32.gmra.mrb[0].mxu0 %v288
    %v378 = vpop.f32.mrb[0].mxu0
    %v379 = vadd.f32 %v306, %v378
    %v380 = vpop.f32.mrb[0].mxu0
    %381 = vmatprep.mubr.f32.mxu0 0.0
    %382 = vmatmul.mubr.f32.gmra.mrb[0].mxu0 %v289
    %v383 = vpop.f32.mrb[0].mxu0
    %v384 = vadd.f32 %v306, %v383
    %v385 = vpop.f32.mrb[0].mxu0
    %386 = vmatprep.mubr.f32.mxu0 0.0
    %387 = vmatmul.mubr.f32.gmra.mrb[0].mxu0 %v290
    %v388 = vpop.f32.mrb[0].mxu0
    %v389 = vadd.f32 %v306, %v388
    %v390 = vpop.f32.mrb[0].mxu0
    %391 = vmatprep.mubr.f32.mxu0 0.0
    %392 = vmatmul.mubr.f32.gmra.mrb[0].mxu0 %v291
    %v393 = vpop.f32.mrb[0].mxu0
    %v394 = vadd.f32 %v306, %v393
    %v395 = vpop.f32.mrb[0].mxu0
    %396 = vmatprep.mubr.f32.mxu0 0.0
    %397 = vmatmul.mubr.f32.gmra.mrb[0].mxu0 %v292
    %v398 = vpop.f32.mrb[0].mxu0
    %v399 = vadd.f32 %v306, %v398
    %v400 = vpop.f32.mrb[0].mxu0
    %401 = vmatprep.mubr.f32.mxu0 0.0
    %402 = vmatmul.mubr.f32.gmra.mrb[0].mxu0 %v293
    %v403 = vpop.f32.mrb[0].mxu0
    %v404 = vadd.f32 %v306, %v403
    %v405 = vpop.f32.mrb[0].mxu0
    %406 = vmatprep.mubr.f32.mxu0 0.0
    %407 = vmatmul.mubr.f32.gmra.mrb[0].mxu0 %v294
    %v408 = vpop.f32.mrb[0].mxu0
    %v409 = vadd.f32 %v306, %v408
    %v410 = vpop.f32.mrb[0].mxu0
    %411 = vmatprep.mubr.f32.mxu0 0.0
    %412 = vmatmul.mubr.f32.gmra.mrb[0].mxu0 %v295
    %v413 = vpop.f32.mrb[0].mxu0
    %v414 = vadd.f32 %v306, %v413
    %v415 = vpop.f32.mrb[0].mxu0
    %416 = vmatprep.mubr.f32.mxu0 0.0
    %417 = vmatmul.mubr.f32.gmra.mrb[0].mxu0 %v296
    %v418 = vpop.f32.mrb[0].mxu0
    %v419 = vadd.f32 %v306, %v418
    %v420 = vpop.f32.mrb[0].mxu0
    %421 = vmatprep.mubr.f32.mxu0 0.0
    %422 = vmatmul.mubr.f32.gmra.mrb[0].mxu0 %v297
    %v423 = vpop.f32.mrb[0].mxu0
    %v424 = vadd.f32 %v306, %v423
    %v425 = vpop.f32.mrb[0].mxu0
    %426 = vmatprep.mubr.f32.mxu0 0.0
    %427 = vmatmul.mubr.f32.gmra.mrb[0].mxu0 %v298
    %v428 = vpop.f32.mrb[0].mxu0
    %v429 = vadd.f32 %v306, %v428
    %v430 = vpop.f32.mrb[0].mxu0
    %431 = vmatprep.mubr.f32.mxu0 0.0
    %432 = vmatmul.mubr.f32.gmra.mrb[0].mxu0 %v299
    %v433 = vpop.f32.mrb[0].mxu0
    %v434 = vadd.f32 %v306, %v433
    %v435 = vpop.f32.mrb[0].mxu0
    %436 = vmatprep.mubr.f32.mxu0 0.0
    %437 = vmatmul.mubr.f32.gmra.mrb[0].mxu0 %v300
    %v438 = vpop.f32.mrb[0].mxu0
    %v439 = vadd.f32 %v306, %v438
    %v440 = vpop.f32.mrb[0].mxu0
    %441 = vmatprep.mubr.f32.mxu0 0.0
    %442 = vmatmul.mubr.f32.gmra.mrb[0].mxu0 %v301
    %v443 = vpop.f32.mrb[0].mxu0
    %v444 = vadd.f32 %v306, %v443
    %v445 = vpop.f32.mrb[0].mxu0
    %446 = vmatprep.mubr.f32.mxu0 0.0
    %447 = vmatmul.mubr.f32.gmra.mrb[0].mxu0 %v302
    %v448 = vpop.f32.mrb[0].mxu0
    %v449 = vadd.f32 %v306, %v448
    %v450 = vpop.f32.mrb[0].mxu0
    %451 = vdwg.mxu0
    %v452 = vxor.u32 %v374, 2147483648
    %v453 = vxor.u32 %v379, 2147483648
    %v454 = vxor.u32 %v384, 2147483648
    %v455 = vxor.u32 %v389, 2147483648
    %v456 = vxor.u32 %v394, 2147483648
    %v457 = vxor.u32 %v399, 2147483648
    %v458 = vxor.u32 %v404, 2147483648
    %v459 = vxor.u32 %v409, 2147483648
    %v460 = vxor.u32 %v414, 2147483648
    %v461 = vxor.u32 %v419, 2147483648
    %v462 = vxor.u32 %v424, 2147483648
    %v463 = vxor.u32 %v429, 2147483648
    %v464 = vxor.u32 %v434, 2147483648
    %v465 = vxor.u32 %v439, 2147483648
    %v466 = vxor.u32 %v444, 2147483648
    %v467 = vxor.u32 %v449, 2147483648
    %v468 = vmul.f32 %v452, 1.442695
    %v469 = vpow.pop %v468
    %v470 = vmul.f32 %v453, 1.442695
    %v471 = vpow.pop %v470
    %v472 = vmul.f32 %v454, 1.442695
    %v473 = vpow.pop %v472
    %v474 = vmul.f32 %v455, 1.442695
    %v475 = vpow.pop %v474
    %v476 = vmul.f32 %v456, 1.442695
    %v477 = vpow.pop %v476
    %v478 = vmul.f32 %v457, 1.442695
    %v479 = vpow.pop %v478
    %v480 = vmul.f32 %v458, 1.442695
    %v481 = vpow.pop %v480
    %v482 = vmul.f32 %v459, 1.442695
    %v483 = vpow.pop %v482
    %v484 = vmul.f32 %v460, 1.442695
    %v485 = vpow.pop %v484
    %v486 = vmul.f32 %v461, 1.442695
    %v487 = vpow.pop %v486
    %v488 = vmul.f32 %v462, 1.442695
    %v489 = vpow.pop %v488
    %v490 = vmul.f32 %v463, 1.442695
    %v491 = vpow.pop %v490
    %v492 = vmul.f32 %v464, 1.442695
    %v493 = vpow.pop %v492
    %v494 = vmul.f32 %v465, 1.442695
    %v495 = vpow.pop %v494
    %v496 = vmul.f32 %v466, 1.442695
    %v497 = vpow.pop %v496
    %v498 = vmul.f32 %v467, 1.442695
    %v499 = vpow.pop %v498
    %v500 = vadd.f32 %v469, 1.0
    %v501 = vadd.f32 %v471, 1.0
    %v502 = vadd.f32 %v473, 1.0
    %v503 = vadd.f32 %v475, 1.0
    %v504 = vadd.f32 %v477, 1.0
    %v505 = vadd.f32 %v479, 1.0
    %v506 = vadd.f32 %v481, 1.0
    %v507 = vadd.f32 %v483, 1.0
    %v508 = vadd.f32 %v485, 1.0
    %v509 = vadd.f32 %v487, 1.0
    %v510 = vadd.f32 %v489, 1.0
    %v511 = vadd.f32 %v491, 1.0
    %v512 = vadd.f32 %v493, 1.0
    %v513 = vadd.f32 %v495, 1.0
    %v514 = vadd.f32 %v497, 1.0
    %v515 = vadd.f32 %v499, 1.0
    %v516 = vrcp.pop %v500
    %v517 = vmul.f32 1.0, %v516
    %v518 = vrcp.pop %v501
    %v519 = vmul.f32 1.0, %v518
    %v520 = vrcp.pop %v502
    %v521 = vmul.f32 1.0, %v520
    %v522 = vrcp.pop %v503
    %v523 = vmul.f32 1.0, %v522
    %v524 = vrcp.pop %v504
    %v525 = vmul.f32 1.0, %v524
    %v526 = vrcp.pop %v505
    %v527 = vmul.f32 1.0, %v526
    %v528 = vrcp.pop %v506
    %v529 = vmul.f32 1.0, %v528
    %v530 = vrcp.pop %v507
    %v531 = vmul.f32 1.0, %v530
    %v532 = vrcp.pop %v508
    %v533 = vmul.f32 1.0, %v532
    %v534 = vrcp.pop %v509
    %v535 = vmul.f32 1.0, %v534
    %v536 = vrcp.pop %v510
    %v537 = vmul.f32 1.0, %v536
    %v538 = vrcp.pop %v511
    %v539 = vmul.f32 1.0, %v538
    %v540 = vrcp.pop %v512
    %v541 = vmul.f32 1.0, %v540
    %v542 = vrcp.pop %v513
    %v543 = vmul.f32 1.0, %v542
    %v544 = vrcp.pop %v514
    %v545 = vmul.f32 1.0, %v544
    %v546 = vrcp.pop %v515
    %v547 = vmul.f32 1.0, %v546
    %v548 = vlaneseq
    %v549 = vshrl.u32 %v548, 7
    %v550 = vsub.s32 0, %v549
    %v551 = vrot.slane %v136, %v550
    %552 = vmatprep.subr.mxu0 0.0
    %553 = vmatpush1.msra.mxu0 %v102
    %554 = vmatprep.subr.mxu0 0.0
    %555 = vmatpush1.msra.mxu0 %v103
    %556 = vmatprep.subr.mxu0 0.0
    %557 = vmatpush1.msra.mxu0 %v104
    %558 = vmatprep.subr.mxu0 0.0
    %559 = vmatpush1.msra.mxu0 %v105
    %560 = vmatprep.subr.mxu0 0.0
    %561 = vmatpush1.msra.mxu0 %v106
    %562 = vmatprep.subr.mxu0 0.0
    %563 = vmatpush1.msra.mxu0 %v107
    %564 = vmatprep.subr.mxu0 0.0
    %565 = vmatpush1.msra.mxu0 %v108
    %566 = vmatprep.subr.mxu0 0.0
    %567 = vmatpush1.msra.mxu0 %v109
    %568 = vmatprep.subr.mxu0 0.0
    %569 = vmatpush1.msra.mxu0 %v110
    %570 = vmatprep.subr.mxu0 0.0
    %571 = vmatpush1.msra.mxu0 %v111
    %572 = vmatprep.subr.mxu0 0.0
    %573 = vmatpush1.msra.mxu0 %v112
    %574 = vmatprep.subr.mxu0 0.0
    %575 = vmatpush1.msra.mxu0 %v113
    %576 = vmatprep.subr.mxu0 0.0
    %577 = vmatpush1.msra.mxu0 %v114
    %578 = vmatprep.subr.mxu0 0.0
    %579 = vmatpush1.msra.mxu0 %v115
    %580 = vmatprep.subr.mxu0 0.0
    %581 = vmatpush1.msra.mxu0 %v116
    %582 = vmatprep.subr.mxu0 0.0
    %583 = vmatpush1.msra.mxu0 %v117
    %584 = vmatprep.subr.mxu0 0.0
    %585 = vmatpush1.msra.mxu0 0.0
    %586 = vmatprep.subr.mxu0 0.0
    %587 = vmatpush1.msra.mxu0 0.0
    %588 = vmatprep.subr.mxu0 0.0
    %589 = vmatpush1.msra.mxu0 0.0
    %590 = vmatprep.subr.mxu0 0.0
    %591 = vmatpush1.msra.mxu0 0.0
    %592 = vmatprep.subr.mxu0 0.0
    %593 = vmatpush1.msra.mxu0 0.0
    %594 = vmatprep.subr.mxu0 0.0
    %595 = vmatpush1.msra.mxu0 0.0
    %596 = vmatprep.subr.mxu0 0.0
    %597 = vmatpush1.msra.mxu0 0.0
    %598 = vmatprep.subr.mxu0 0.0
    %599 = vmatpush1.msra.mxu0 0.0
    %600 = vmatprep.subr.mxu0 0.0
    %601 = vmatpush1.msra.mxu0 0.0
    %602 = vmatprep.subr.mxu0 0.0
    %603 = vmatpush1.msra.mxu0 0.0
    %604 = vmatprep.subr.mxu0 0.0
    %605 = vmatpush1.msra.mxu0 0.0
    %606 = vmatprep.subr.mxu0 0.0
    %607 = vmatpush1.msra.mxu0 0.0
    %608 = vmatprep.subr.mxu0 0.0
    %609 = vmatpush1.msra.mxu0 0.0
    %610 = vmatprep.subr.mxu0 0.0
    %611 = vmatpush1.msra.mxu0 0.0
    %612 = vmatprep.subr.mxu0 0.0
    %613 = vmatpush1.msra.mxu0 0.0
    %614 = vmatprep.subr.mxu0 0.0
    %615 = vmatpush1.msra.mxu0 0.0
    %616 = vmatprep.mubr.f32.mxu0 0.0
    %617 = vmatmul.mubr.f32.gmra.mrb[0].mxu0 %v517
    %v618 = vpop.f32.mrb[0].mxu0
    %v619 = vadd.f32 %v551, %v618
    %v620 = vpop.f32.mrb[0].mxu0
    %621 = vmatprep.mubr.f32.mxu0 0.0
    %622 = vmatmul.mubr.f32.gmra.mrb[0].mxu0 %v519
    %v623 = vpop.f32.mrb[0].mxu0
    %v624 = vadd.f32 %v551, %v623
    %v625 = vpop.f32.mrb[0].mxu0
    %626 = vmatprep.mubr.f32.mxu0 0.0
    %627 = vmatmul.mubr.f32.gmra.mrb[0].mxu0 %v521
    %v628 = vpop.f32.mrb[0].mxu0
    %v629 = vadd.f32 %v551, %v628
    %v630 = vpop.f32.mrb[0].mxu0
    %631 = vmatprep.mubr.f32.mxu0 0.0
    %632 = vmatmul.mubr.f32.gmra.mrb[0].mxu0 %v523
    %v633 = vpop.f32.mrb[0].mxu0
    %v634 = vadd.f32 %v551, %v633
    %v635 = vpop.f32.mrb[0].mxu0
    %636 = vmatprep.mubr.f32.mxu0 0.0
    %637 = vmatmul.mubr.f32.gmra.mrb[0].mxu0 %v525
    %v638 = vpop.f32.mrb[0].mxu0
    %v639 = vadd.f32 %v551, %v638
    %v640 = vpop.f32.mrb[0].mxu0
    %641 = vmatprep.mubr.f32.mxu0 0.0
    %642 = vmatmul.mubr.f32.gmra.mrb[0].mxu0 %v527
    %v643 = vpop.f32.mrb[0].mxu0
    %v644 = vadd.f32 %v551, %v643
    %v645 = vpop.f32.mrb[0].mxu0
    %646 = vmatprep.mubr.f32.mxu0 0.0
    %647 = vmatmul.mubr.f32.gmra.mrb[0].mxu0 %v529
    %v648 = vpop.f32.mrb[0].mxu0
    %v649 = vadd.f32 %v551, %v648
    %v650 = vpop.f32.mrb[0].mxu0
    %651 = vmatprep.mubr.f32.mxu0 0.0
    %652 = vmatmul.mubr.f32.gmra.mrb[0].mxu0 %v531
    %v653 = vpop.f32.mrb[0].mxu0
    %v654 = vadd.f32 %v551, %v653
    %v655 = vpop.f32.mrb[0].mxu0
    %656 = vmatprep.mubr.f32.mxu0 0.0
    %657 = vmatmul.mubr.f32.gmra.mrb[0].mxu0 %v533
    %v658 = vpop.f32.mrb[0].mxu0
    %v659 = vadd.f32 %v551, %v658
    %v660 = vpop.f32.mrb[0].mxu0
    %661 = vmatprep.mubr.f32.mxu0 0.0
    %662 = vmatmul.mubr.f32.gmra.mrb[0].mxu0 %v535
    %v663 = vpop.f32.mrb[0].mxu0
    %v664 = vadd.f32 %v551, %v663
    %v665 = vpop.f32.mrb[0].mxu0
    %666 = vmatprep.mubr.f32.mxu0 0.0
    %667 = vmatmul.mubr.f32.gmra.mrb[0].mxu0 %v537
    %v668 = vpop.f32.mrb[0].mxu0
    %v669 = vadd.f32 %v551, %v668
    %v670 = vpop.f32.mrb[0].mxu0
    %671 = vmatprep.mubr.f32.mxu0 0.0
    %672 = vmatmul.mubr.f32.gmra.mrb[0].mxu0 %v539
    %v673 = vpop.f32.mrb[0].mxu0
    %v674 = vadd.f32 %v551, %v673
    %v675 = vpop.f32.mrb[0].mxu0
    %676 = vmatprep.mubr.f32.mxu0 0.0
    %677 = vmatmul.mubr.f32.gmra.mrb[0].mxu0 %v541
    %v678 = vpop.f32.mrb[0].mxu0
    %v679 = vadd.f32 %v551, %v678
    %v680 = vpop.f32.mrb[0].mxu0
    %681 = vmatprep.mubr.f32.mxu0 0.0
    %682 = vmatmul.mubr.f32.gmra.mrb[0].mxu0 %v543
    %v683 = vpop.f32.mrb[0].mxu0
    %v684 = vadd.f32 %v551, %v683
    %v685 = vpop.f32.mrb[0].mxu0
    %686 = vmatprep.mubr.f32.mxu0 0.0
    %687 = vmatmul.mubr.f32.gmra.mrb[0].mxu0 %v545
    %v688 = vpop.f32.mrb[0].mxu0
    %v689 = vadd.f32 %v551, %v688
    %v690 = vpop.f32.mrb[0].mxu0
    %691 = vmatprep.mubr.f32.mxu0 0.0
    %692 = vmatmul.mubr.f32.gmra.mrb[0].mxu0 %v547
    %v693 = vpop.f32.mrb[0].mxu0
    %v694 = vadd.f32 %v551, %v693
    %v695 = vpop.f32.mrb[0].mxu0
    %696 = vdwg.mxu0
    %v697 = vmax.f32 %v619, 0.0
    %v698 = vmax.f32 %v624, 0.0
    %v699 = vmax.f32 %v629, 0.0
    %v700 = vmax.f32 %v634, 0.0
    %v701 = vmax.f32 %v639, 0.0
    %v702 = vmax.f32 %v644, 0.0
    %v703 = vmax.f32 %v649, 0.0
    %v704 = vmax.f32 %v654, 0.0
    %v705 = vmax.f32 %v659, 0.0
    %v706 = vmax.f32 %v664, 0.0
    %v707 = vmax.f32 %v669, 0.0
    %v708 = vmax.f32 %v674, 0.0
    %v709 = vmax.f32 %v679, 0.0
    %v710 = vmax.f32 %v684, 0.0
    %v711 = vmax.f32 %v689, 0.0
    %v712 = vmax.f32 %v694, 0.0
    %v713 = vlaneseq
    %v714 = vshrl.u32 %v713, 7
    %v715 = vsub.s32 0, %v714
    %v716 = vrot.slane %v137, %v715
    %717 = vmatprep.subr.mxu0 0.0
    %718 = vmatpush1.msra.mxu0 %v118
    %719 = vmatprep.subr.mxu0 0.0
    %720 = vmatpush1.msra.mxu0 %v119
    %721 = vmatprep.subr.mxu0 0.0
    %722 = vmatpush1.msra.mxu0 %v120
    %723 = vmatprep.subr.mxu0 0.0
    %724 = vmatpush1.msra.mxu0 %v121
    %725 = vmatprep.subr.mxu0 0.0
    %726 = vmatpush1.msra.mxu0 %v122
    %727 = vmatprep.subr.mxu0 0.0
    %728 = vmatpush1.msra.mxu0 %v123
    %729 = vmatprep.subr.mxu0 0.0
    %730 = vmatpush1.msra.mxu0 %v124
    %731 = vmatprep.subr.mxu0 0.0
    %732 = vmatpush1.msra.mxu0 %v125
    %733 = vmatprep.subr.mxu0 0.0
    %734 = vmatpush1.msra.mxu0 %v126
    %735 = vmatprep.subr.mxu0 0.0
    %736 = vmatpush1.msra.mxu0 %v127
    %737 = vmatprep.subr.mxu0 0.0
    %738 = vmatpush1.msra.mxu0 %v128
    %739 = vmatprep.subr.mxu0 0.0
    %740 = vmatpush1.msra.mxu0 %v129
    %741 = vmatprep.subr.mxu0 0.0
    %742 = vmatpush1.msra.mxu0 %v130
    %743 = vmatprep.subr.mxu0 0.0
    %744 = vmatpush1.msra.mxu0 %v131
    %745 = vmatprep.subr.mxu0 0.0
    %746 = vmatpush1.msra.mxu0 %v132
    %747 = vmatprep.subr.mxu0 0.0
    %748 = vmatpush1.msra.mxu0 %v133
    %749 = vmatprep.subr.mxu0 0.0
    %750 = vmatpush1.msra.mxu0 0.0
    %751 = vmatprep.subr.mxu0 0.0
    %752 = vmatpush1.msra.mxu0 0.0
    %753 = vmatprep.subr.mxu0 0.0
    %754 = vmatpush1.msra.mxu0 0.0
    %755 = vmatprep.subr.mxu0 0.0
    %756 = vmatpush1.msra.mxu0 0.0
    %757 = vmatprep.subr.mxu0 0.0
    %758 = vmatpush1.msra.mxu0 0.0
    %759 = vmatprep.subr.mxu0 0.0
    %760 = vmatpush1.msra.mxu0 0.0
    %761 = vmatprep.subr.mxu0 0.0
    %762 = vmatpush1.msra.mxu0 0.0
    %763 = vmatprep.subr.mxu0 0.0
    %764 = vmatpush1.msra.mxu0 0.0
    %765 = vmatprep.subr.mxu0 0.0
    %766 = vmatpush1.msra.mxu0 0.0
    %767 = vmatprep.subr.mxu0 0.0
    %768 = vmatpush1.msra.mxu0 0.0
    %769 = vmatprep.subr.mxu0 0.0
    %770 = vmatpush1.msra.mxu0 0.0
    %771 = vmatprep.subr.mxu0 0.0
    %772 = vmatpush1.msra.mxu0 0.0
    %773 = vmatprep.subr.mxu0 0.0
    %774 = vmatpush1.msra.mxu0 0.0
    %775 = vmatprep.subr.mxu0 0.0
    %776 = vmatpush1.msra.mxu0 0.0
    %777 = vmatprep.subr.mxu0 0.0
    %778 = vmatpush1.msra.mxu0 0.0
    %779 = vmatprep.subr.mxu0 0.0
    %780 = vmatpush1.msra.mxu0 0.0
    %781 = vmatprep.mubr.f32.mxu0 0.0
    %782 = vmatmul.mubr.f32.gmra.mrb[0].mxu0 %v697
    %v783 = vpop.f32.mrb[0].mxu0
    %v784 = vadd.f32 %v716, %v783
    %v785 = vpop.f32.mrb[0].mxu0
    %786 = vmatprep.mubr.f32.mxu0 0.0
    %787 = vmatmul.mubr.f32.gmra.mrb[0].mxu0 %v698
    %v788 = vpop.f32.mrb[0].mxu0
    %v789 = vadd.f32 %v716, %v788
    %v790 = vpop.f32.mrb[0].mxu0
    %791 = vmatprep.mubr.f32.mxu0 0.0
    %792 = vmatmul.mubr.f32.gmra.mrb[0].mxu0 %v699
    %v793 = vpop.f32.mrb[0].mxu0
    %v794 = vadd.f32 %v716, %v793
    %v795 = vpop.f32.mrb[0].mxu0
    %796 = vmatprep.mubr.f32.mxu0 0.0
    %797 = vmatmul.mubr.f32.gmra.mrb[0].mxu0 %v700
    %v798 = vpop.f32.mrb[0].mxu0
    %v799 = vadd.f32 %v716, %v798
    %v800 = vpop.f32.mrb[0].mxu0
    %801 = vmatprep.mubr.f32.mxu0 0.0
    %802 = vmatmul.mubr.f32.gmra.mrb[0].mxu0 %v701
    %v803 = vpop.f32.mrb[0].mxu0
    %v804 = vadd.f32 %v716, %v803
    %v805 = vpop.f32.mrb[0].mxu0
    %806 = vmatprep.mubr.f32.mxu0 0.0
    %807 = vmatmul.mubr.f32.gmra.mrb[0].mxu0 %v702
    %v808 = vpop.f32.mrb[0].mxu0
    %v809 = vadd.f32 %v716, %v808
    %v810 = vpop.f32.mrb[0].mxu0
    %811 = vmatprep.mubr.f32.mxu0 0.0
    %812 = vmatmul.mubr.f32.gmra.mrb[0].mxu0 %v703
    %v813 = vpop.f32.mrb[0].mxu0
    %v814 = vadd.f32 %v716, %v813
    %v815 = vpop.f32.mrb[0].mxu0
    %816 = vmatprep.mubr.f32.mxu0 0.0
    %817 = vmatmul.mubr.f32.gmra.mrb[0].mxu0 %v704
    %v818 = vpop.f32.mrb[0].mxu0
    %v819 = vadd.f32 %v716, %v818
    %v820 = vpop.f32.mrb[0].mxu0
    %821 = vmatprep.mubr.f32.mxu0 0.0
    %822 = vmatmul.mubr.f32.gmra.mrb[0].mxu0 %v705
    %v823 = vpop.f32.mrb[0].mxu0
    %v824 = vadd.f32 %v716, %v823
    %v825 = vpop.f32.mrb[0].mxu0
    %826 = vmatprep.mubr.f32.mxu0 0.0
    %827 = vmatmul.mubr.f32.gmra.mrb[0].mxu0 %v706
    %v828 = vpop.f32.mrb[0].mxu0
    %v829 = vadd.f32 %v716, %v828
    %v830 = vpop.f32.mrb[0].mxu0
    %831 = vmatprep.mubr.f32.mxu0 0.0
    %832 = vmatmul.mubr.f32.gmra.mrb[0].mxu0 %v707
    %v833 = vpop.f32.mrb[0].mxu0
    %v834 = vadd.f32 %v716, %v833
    %v835 = vpop.f32.mrb[0].mxu0
    %836 = vmatprep.mubr.f32.mxu0 0.0
    %837 = vmatmul.mubr.f32.gmra.mrb[0].mxu0 %v708
    %v838 = vpop.f32.mrb[0].mxu0
    %v839 = vadd.f32 %v716, %v838
    %v840 = vpop.f32.mrb[0].mxu0
    %841 = vmatprep.mubr.f32.mxu0 0.0
    %842 = vmatmul.mubr.f32.gmra.mrb[0].mxu0 %v709
    %v843 = vpop.f32.mrb[0].mxu0
    %v844 = vadd.f32 %v716, %v843
    %v845 = vpop.f32.mrb[0].mxu0
    %846 = vmatprep.mubr.f32.mxu0 0.0
    %847 = vmatmul.mubr.f32.gmra.mrb[0].mxu0 %v710
    %v848 = vpop.f32.mrb[0].mxu0
    %v849 = vadd.f32 %v716, %v848
    %v850 = vpop.f32.mrb[0].mxu0
    %851 = vmatprep.mubr.f32.mxu0 0.0
    %852 = vmatmul.mubr.f32.gmra.mrb[0].mxu0 %v711
    %v853 = vpop.f32.mrb[0].mxu0
    %v854 = vadd.f32 %v716, %v853
    %v855 = vpop.f32.mrb[0].mxu0
    %856 = vmatprep.mubr.f32.mxu0 0.0
    %857 = vmatmul.mubr.f32.gmra.mrb[0].mxu0 %v712
    %v858 = vpop.f32.mrb[0].mxu0
    %v859 = vadd.f32 %v716, %v858
    %v860 = vpop.f32.mrb[0].mxu0
    %861 = vdwg.mxu0
    %v862 = vxor.u32 %v784, 2147483648
    %v863 = vxor.u32 %v789, 2147483648
    %v864 = vxor.u32 %v794, 2147483648
    %v865 = vxor.u32 %v799, 2147483648
    %v866 = vxor.u32 %v804, 2147483648
    %v867 = vxor.u32 %v809, 2147483648
    %v868 = vxor.u32 %v814, 2147483648
    %v869 = vxor.u32 %v819, 2147483648
    %v870 = vxor.u32 %v824, 2147483648
    %v871 = vxor.u32 %v829, 2147483648
    %v872 = vxor.u32 %v834, 2147483648
    %v873 = vxor.u32 %v839, 2147483648
    %v874 = vxor.u32 %v844, 2147483648
    %v875 = vxor.u32 %v849, 2147483648
    %v876 = vxor.u32 %v854, 2147483648
    %v877 = vxor.u32 %v859, 2147483648
    %v878 = vmul.f32 %v862, 1.442695
    %v879 = vpow.pop %v878
    %v880 = vmul.f32 %v863, 1.442695
    %v881 = vpow.pop %v880
    %v882 = vmul.f32 %v864, 1.442695
    %v883 = vpow.pop %v882
    %v884 = vmul.f32 %v865, 1.442695
    %v885 = vpow.pop %v884
    %v886 = vmul.f32 %v866, 1.442695
    %v887 = vpow.pop %v886
    %v888 = vmul.f32 %v867, 1.442695
    %v889 = vpow.pop %v888
    %v890 = vmul.f32 %v868, 1.442695
    %v891 = vpow.pop %v890
    %v892 = vmul.f32 %v869, 1.442695
    %v893 = vpow.pop %v892
    %v894 = vmul.f32 %v870, 1.442695
    %v895 = vpow.pop %v894
    %v896 = vmul.f32 %v871, 1.442695
    %v897 = vpow.pop %v896
    %v898 = vmul.f32 %v872, 1.442695
    %v899 = vpow.pop %v898
    %v900 = vmul.f32 %v873, 1.442695
    %v901 = vpow.pop %v900
    %v902 = vmul.f32 %v874, 1.442695
    %v903 = vpow.pop %v902
    %v904 = vmul.f32 %v875, 1.442695
    %v905 = vpow.pop %v904
    %v906 = vmul.f32 %v876, 1.442695
    %v907 = vpow.pop %v906
    %v908 = vmul.f32 %v877, 1.442695
    %v909 = vpow.pop %v908
    %v910 = vadd.f32 %v879, 1.0
    %v911 = vadd.f32 %v881, 1.0
    %v912 = vadd.f32 %v883, 1.0
    %v913 = vadd.f32 %v885, 1.0
    %v914 = vadd.f32 %v887, 1.0
    %v915 = vadd.f32 %v889, 1.0
    %v916 = vadd.f32 %v891, 1.0
    %v917 = vadd.f32 %v893, 1.0
    %v918 = vadd.f32 %v895, 1.0
    %v919 = vadd.f32 %v897, 1.0
    %v920 = vadd.f32 %v899, 1.0
    %v921 = vadd.f32 %v901, 1.0
    %v922 = vadd.f32 %v903, 1.0
    %v923 = vadd.f32 %v905, 1.0
    %v924 = vadd.f32 %v907, 1.0
    %v925 = vadd.f32 %v909, 1.0
    %v926 = vrcp.pop %v910
    %v927 = vmul.f32 1.0, %v926
    %v928 = vrcp.pop %v911
    %v929 = vmul.f32 1.0, %v928
    %v930 = vrcp.pop %v912
    %v931 = vmul.f32 1.0, %v930
    %v932 = vrcp.pop %v913
    %v933 = vmul.f32 1.0, %v932
    %v934 = vrcp.pop %v914
    %v935 = vmul.f32 1.0, %v934
    %v936 = vrcp.pop %v915
    %v937 = vmul.f32 1.0, %v936
    %v938 = vrcp.pop %v916
    %v939 = vmul.f32 1.0, %v938
    %v940 = vrcp.pop %v917
    %v941 = vmul.f32 1.0, %v940
    %v942 = vrcp.pop %v918
    %v943 = vmul.f32 1.0, %v942
    %v944 = vrcp.pop %v919
    %v945 = vmul.f32 1.0, %v944
    %v946 = vrcp.pop %v920
    %v947 = vmul.f32 1.0, %v946
    %v948 = vrcp.pop %v921
    %v949 = vmul.f32 1.0, %v948
    %v950 = vrcp.pop %v922
    %v951 = vmul.f32 1.0, %v950
    %v952 = vrcp.pop %v923
    %v953 = vmul.f32 1.0, %v952
    %v954 = vrcp.pop %v924
    %v955 = vmul.f32 1.0, %v954
    %v956 = vrcp.pop %v925
    %v957 = vmul.f32 1.0, %v956
    %v958 = vmul.f32 %v54, %v927
    %v959 = vmul.f32 %v55, %v929
    %v960 = vmul.f32 %v56, %v931
    %v961 = vmul.f32 %v57, %v933
    %v962 = vmul.f32 %v58, %v935
    %v963 = vmul.f32 %v59, %v937
    %v964 = vmul.f32 %v60, %v939
    %v965 = vmul.f32 %v61, %v941
    %v966 = vmul.f32 %v62, %v943
    %v967 = vmul.f32 %v63, %v945
    %v968 = vmul.f32 %v64, %v947
    %v969 = vmul.f32 %v65, %v949
    %v970 = vmul.f32 %v66, %v951
    %v971 = vmul.f32 %v67, %v953
    %v972 = vmul.f32 %v68, %v955
    %v973 = vmul.f32 %v69, %v957
    %v974 = vpack.c.bf16 %v959, %v958
    %v975 = vpack.c.bf16 %v961, %v960
    %v976 = vpack.c.bf16 %v963, %v962
    %v977 = vpack.c.bf16 %v965, %v964
    %v978 = vpack.c.bf16 %v967, %v966
    %v979 = vpack.c.bf16 %v969, %v968
    %v980 = vpack.c.bf16 %v971, %v970
    %v981 = vpack.c.bf16 %v973, %v972
    %v990 = vunpack.c.l.b16 %v974
    %v991 = vunpack.c.h.b16 %v974
    %v992 = vunpack.c.l.b16 %v975
    %v993 = vunpack.c.h.b16 %v975
    %v994 = vunpack.c.l.b16 %v976
    %v995 = vunpack.c.h.b16 %v976
    %v996 = vunpack.c.l.b16 %v977
    %v997 = vunpack.c.h.b16 %v977
    %v998 = vunpack.c.l.b16 %v978
    %v999 = vunpack.c.h.b16 %v978
    %v1000 = vunpack.c.l.b16 %v979
    %v1001 = vunpack.c.h.b16 %v979
    %v1002 = vunpack.c.l.b16 %v980
    %v1003 = vunpack.c.h.b16 %v980
    %v1004 = vunpack.c.l.b16 %v981
    %v1005 = vunpack.c.h.b16 %v981
    %v1006 = vpack.c.b16 %v990, %v990
    %v1007 = vpack.c.b16 %v991, %v991
    %v1008 = vpack.c.b16 %v992, %v992
    %v1009 = vpack.c.b16 %v993, %v993
    %v1010 = vpack.c.b16 %v994, %v994
    %v1011 = vpack.c.b16 %v995, %v995
    %v1012 = vpack.c.b16 %v996, %v996
    %v1013 = vpack.c.b16 %v997, %v997
    %v1014 = vpack.c.b16 %v998, %v998
    %v1015 = vpack.c.b16 %v999, %v999
    %v1016 = vpack.c.b16 %v1000, %v1000
    %v1017 = vpack.c.b16 %v1001, %v1001
    %v1018 = vpack.c.b16 %v1002, %v1002
    %v1019 = vpack.c.b16 %v1003, %v1003
    %v1020 = vpack.c.b16 %v1004, %v1004
    %v1021 = vpack.c.b16 %v1005, %v1005
    %1038 = vst [vmem:[#allocation8] sm:$0xf] %v1006
    %1039 = vst [vmem:[#allocation8 + $0x4] sm:$0xf] %v1007
    %1040 = vst [vmem:[#allocation8 + $0x8] sm:$0xf] %v1008
    %1041 = vst [vmem:[#allocation8 + $0xc] sm:$0xf] %v1009
    %1042 = vst [vmem:[#allocation8 + $0x10] sm:$0xf] %v1010
    %1043 = vst [vmem:[#allocation8 + $0x14] sm:$0xf] %v1011
    %1044 = vst [vmem:[#allocation8 + $0x18] sm:$0xf] %v1012
    %1045 = vst [vmem:[#allocation8 + $0x1c] sm:$0xf] %v1013
    %1046 = vst [vmem:[#allocation8 + $0x20] sm:$0xf] %v1014
    %1047 = vst [vmem:[#allocation8 + $0x24] sm:$0xf] %v1015
    %1048 = vst [vmem:[#allocation8 + $0x28] sm:$0xf] %v1016
    %1049 = vst [vmem:[#allocation8 + $0x2c] sm:$0xf] %v1017
    %1050 = vst [vmem:[#allocation8 + $0x30] sm:$0xf] %v1018
    %1051 = vst [vmem:[#allocation8 + $0x34] sm:$0xf] %v1019
    %1052 = vst [vmem:[#allocation8 + $0x38] sm:$0xf] %v1020
    %1053 = vst [vmem:[#allocation8 + $0x3c] sm:$0xf] %v1021
    // Predicated region
    $region26: #{tpu_custom_call.1} parent=1 // pred_check
      _
    $region27: #{tpu_custom_call.1} parent=1 // pred_check_branch
      %1055 = sbr.rel (0) target = $region29
    $region28: #{tpu_custom_call.1} parent=1 // pred_region
      %s1057 = ssub.s32 1024, 1024
      %1058 = vsyncadd [#allocation4], %s1057
      %s1059 = sshll.u32 [#allocation8], 4
      %s1060 = int_to_ptr.vmem [resolvable:$true] %s1059
      %1065 = dma.vmem_to_hbm [thread:$0]  %s1060, 1024, %s3, [#allocation4], 64, 64, 4
    $region29: #{tpu_custom_call.1} parent=1 // pred_fallthru
      _
    // Predicated region
    $region30: #{tpu_custom_call.1} parent=1 // pred_check
      _
    $region31: #{tpu_custom_call.1} parent=1 // pred_check_branch
      %1067 = sbr.rel (0) target = $region33
    $region32: #{tpu_custom_call.1} parent=1 // pred_region
      %1068 = dma.done [#allocation4], 1024
    $region33: #{tpu_custom_call.1} parent=1 // pred_fallthru
      _
    %1069 = vsyncpa [#allocation3], 1
    %1070 = vsyncpa [#allocation6], 1
    %1071 = vsyncpa [#allocation4], 1

</llo_original>
